<compile_context>
chip_gen: v6e
topology: v6e:2x2x1
jax: 0.10.0
libtpu: 0.0.40
codegen_flags: <defaults>
</compile_context>

<pallas_src>
from functools import partial

import jax
import jax.numpy as jnp
from jax.experimental import pallas as pl
from jax.experimental.pallas import tpu as pltpu


# ----------------------------------------------------------------------------- kernel

def qnet_kernel(x_ref, w1_ref, b1_ref, wb_ref, bb_ref, wh_ref, bh_ref, q_ref,
                *, bf16_epilogue):
    # fc1 + ReLU : (bm, 4)bf16 @ (4, 64)bf16 -> (bm, 64) f32 acc
    y = jnp.dot(x_ref[...], w1_ref[...],
                preferred_element_type=jnp.float32) + b1_ref[...]
    y = jnp.maximum(y, 0.0).astype(jnp.bfloat16)

    # fused value|adv branch : (bm, 64) @ (64, 512) -> (bm, 512)
    # lanes [0:256] = value branch, lanes [256:512] = advantage branch.
    h = jnp.dot(y, wb_ref[...], preferred_element_type=jnp.float32)
    if bf16_epilogue:
        # v6e/v7x: bf16-native VPU -> bias + ReLU on bf16, halves live VMEM for h.
        h = jnp.maximum(h.astype(jnp.bfloat16) + bb_ref[...], 0.0)
    else:
        # v5e: no bf16 VPU datapath -> keep the elementwise epilogue in f32.
        h = jnp.maximum(h + bb_ref[...], 0.0).astype(jnp.bfloat16)

    # folded dueling head : (bm, 512) @ (512, 2) -> (bm, 2)
    q = jnp.dot(h, wh_ref[...], preferred_element_type=jnp.float32) + bh_ref[...]
    q_ref[...] = q.astype(q_ref.dtype)


# ------------------------------------------------------------------- parameter folding

def prepare_params(params, *, bf16_epilogue=True):
    """Fuse branches and fold the dueling combine into the head weights.

    Run ONCE per parameter update (hoisted out of the per-call path).
    Input: 10 raw params (f32, (in,out) weights, (1,out) biases).
    Output: (w1, b1, w_branch, b_branch, w_head, b_head); weights bf16, biases f32
    (branch bias bf16 when the bf16 epilogue is used).
    """
    (w1, b1, wv, bv, wa, ba, wval, bval, wadv, badv) = params

    # One matmul for both branches: columns [0:256] -> value, [256:512] -> adv.
    w_branch = jnp.concatenate([wv, wa], axis=1)            # (64, 512)
    b_branch = jnp.concatenate([bv, ba], axis=1)            # (1, 512)

    # Q = V + A - mean(A, axis=1):
    #   A - mean(A) = ah @ (wadv - mean_cols(wadv)) + (badv - mean(badv))
    #   V broadcast over actions = vh @ tile(wval, n_actions) + bval
    n_actions = wadv.shape[1]
    wadv_c = wadv - jnp.mean(wadv, axis=1, keepdims=True)   # (256, 2)
    badv_c = badv - jnp.mean(badv, axis=1, keepdims=True)   # (1, 2)
    wval2 = jnp.broadcast_to(wval, (wval.shape[0], n_actions))  # (256, 2)
    w_head = jnp.concatenate([wval2, wadv_c], axis=0)        # (512, 2)
    b_head = bval + badv_c                                   # (1, 2)

    bb_dtype = jnp.bfloat16 if bf16_epilogue else jnp.float32
    return (w1.astype(jnp.bfloat16), b1.astype(jnp.float32),
            w_branch.astype(jnp.bfloat16), b_branch.astype(bb_dtype),
            w_head.astype(jnp.bfloat16), b_head.astype(jnp.float32))


# --------------------------------------------------------------------------- wrapper

def _round_up(n, m):
    return ((n + m - 1) // m) * m


def _choose_bm(B):
    """Batch tile: one tile for small B; for large B split so v7x's 2 TensorCores
    each get work, capped at 2048 rows (~5-6 MB live VMEM per step)."""
    if B <= 512:
        return _round_up(B, 8)
    return min(2048, _round_up(pl.cdiv(B, 2), 8))


def _supports_bf16_vpu():
    """bf16 epilogue only on chips with a bf16 VPU datapath (v6e/v7x), not v5e."""
    try:
        kind = jax.devices()[0].device_kind.lower()
    except Exception:
        return True
    return not any(tag in kind for tag in ("v5e", "v5 lite", "v5lite"))


@partial(jax.jit, static_argnames=("bf16_epilogue", "bm"))
def qnetwork_forward(state, w1, b1, wb, bb, wh, bh, *, bf16_epilogue=True, bm=None):
    """state: (B, 4) float32; params pre-folded by prepare_params(). Returns (B, 2) f32."""
    B, F = state.shape
    assert F == 4
    if bm is None:
        bm = _choose_bm(B)

    # Partial last block is fine: Pallas masks OOB rows of the output block on write,
    # so no pad/slice round-trips of state / q are needed.
    grid = (pl.cdiv(B, bm),)

    # Halve input DMA bytes; the first dot already runs in bf16.
    x = state.astype(jnp.bfloat16)

    def bcast(i):
        return (0, 0)

    weight_bytes = (4 * 64 + 64 * 512 + 512 * 2) * 2 + (64 + 512 + 2) * 4
    cost = pl.CostEstimate(
        flops=2 * B * (4 * 64 + 64 * 512 + 512 * 2),
        transcendentals=0,
        bytes_accessed=B * (4 * 2 + 2 * 4) + weight_bytes,
    )

    q = pl.pallas_call(
        partial(qnet_kernel, bf16_epilogue=bf16_epilogue),
        out_shape=jax.ShapeDtypeStruct((B, 2), jnp.float32),
        grid_spec=pltpu.PrefetchScalarGridSpec(
            num_scalar_prefetch=0,
            grid=grid,
            in_specs=[
                pl.BlockSpec((bm, 4), lambda i: (i, 0)),      # state tile (bf16)
                # Constant index_map => these blocks are not re-fetched across grid steps.
                pl.BlockSpec((4, 64), bcast),                 # W1 (bf16)
                pl.BlockSpec((1, 64), bcast),                 # b1 (f32)
                pl.BlockSpec((64, 512), bcast),               # W_branch (bf16)
                pl.BlockSpec((1, 512), bcast),                # b_branch (bf16/f32)
                pl.BlockSpec((512, 2), bcast),                # W_head (bf16)
                pl.BlockSpec((1, 2), bcast),                  # b_head (f32)
            ],
            out_specs=pl.BlockSpec((bm, 2), lambda i: (i, 0)),
        ),
        compiler_params=pltpu.CompilerParams(
            dimension_semantics=("parallel",),
            # Raise v5e's 16 MiB scoped default; equals v6e/v7x default, well within
            # v7x's 64 MiB physical VMEM.
            vmem_limit_bytes=32 * 1024 * 1024,
        ),
        cost_estimate=cost,
    )(x, w1, b1, wb, bb, wh, bh)

    return q


# ------------------------------------------------------------------ init & references

def init_params(key):
    """Deterministic init mirroring nn.Linear shapes (stored as (in, out))."""
    def linear(key, fan_in, fan_out):
        kw, kb = jax.random.split(key)
        bound = 1.0 / jnp.sqrt(float(fan_in))
        w = jax.random.uniform(kw, (fan_in, fan_out), jnp.float32, -bound, bound)
        b = jax.random.uniform(kb, (1, fan_out), jnp.float32, -bound, bound)
        return w, b

    k1, k2, k3, k4, k5 = jax.random.split(key, 5)
    w1, b1 = linear(k1, 4, 64)        # fc1
    wv, bv = linear(k2, 64, 256)      # fc_value
    wa, ba = linear(k3, 64, 256)      # fc_adv
    wval, bval = linear(k4, 256, 1)   # value head
    wadv, badv = linear(k5, 256, 2)   # adv head
    return (w1, b1, wv, bv, wa, ba, wval, bval, wadv, badv)


def qnetwork_ref_f32(state, params):
    """Full-precision reference matching the PyTorch forward exactly."""
    (w1, b1, wv, bv, wa, ba, wval, bval, wadv, badv) = params
    y = jax.nn.relu(state @ w1 + b1)
    vh = jax.nn.relu(y @ wv + bv)
    ah = jax.nn.relu(y @ wa + ba)
    value = vh @ wval + bval
    adv = ah @ wadv + badv
    return value + adv - jnp.mean(adv, axis=1, keepdims=True)


def qnetwork_ref_folded(state, prepared, *, bf16_epilogue=True):
    """Pure-JAX reference doing the identical folded / mixed-precision math as the kernel."""
    w1, b1, wb, bb, wh, bh = prepared
    y = jnp.dot(state.astype(jnp.bfloat16), w1,
                preferred_element_type=jnp.float32) + b1
    y = jnp.maximum(y, 0.0).astype(jnp.bfloat16)
    h = jnp.dot(y, wb, preferred_element_type=jnp.float32)
    if bf16_epilogue:
        h = jnp.maximum(h.astype(jnp.bfloat16) + bb, 0.0)
    else:
        h = jnp.maximum(h + bb, 0.0).astype(jnp.bfloat16)
    return jnp.dot(h, wh, preferred_element_type=jnp.float32) + bh


# ------------------------------------------------------------------------------- main

if __name__ == "__main__":
    key = jax.random.PRNGKey(0)
    kp, kx = jax.random.split(key)

    params = init_params(kp)
    state = jax.random.normal(kx, (8, 4), jnp.float32)   # batch=8, state dim=4

    bf16_epi = _supports_bf16_vpu()

    # Hoisted out of the per-call path: fold weights once per parameter update.
    prepared = prepare_params(params, bf16_epilogue=bf16_epi)
    prepared = jax.block_until_ready(prepared)

    q = qnetwork_forward(state, *prepared, bf16_epilogue=bf16_epi)
    q = jax.block_until_ready(q)
    assert q.shape == (8, 2)

    # Tight check vs. a pure-JAX reference doing the identical folded mixed-precision math.
    q_folded = qnetwork_ref_folded(state, prepared, bf16_epilogue=bf16_epi)
    assert jnp.allclose(q, q_folded, atol=1e-3, rtol=1e-3)

    # Semantic check vs. the exact (f32) PyTorch forward; tolerance covers bf16 weights.
    q_f32 = qnetwork_ref_f32(state, params)
    assert jnp.allclose(q, q_f32, atol=5e-2, rtol=5e-2)

    print("KERNEL_OK")
</pallas_src>

<mosaic_0001>
module attributes {stable_mosaic.version = 11 : i64} {
  func.func @qnet_kernel(%arg0: i32, %arg1: memref<8x4xbf16, #tpu.memory_space<vmem>>, %arg2: memref<4x64xbf16, #tpu.memory_space<vmem>>, %arg3: memref<1x64xf32, #tpu.memory_space<vmem>>, %arg4: memref<64x512xbf16, #tpu.memory_space<vmem>>, %arg5: memref<1x512xbf16, #tpu.memory_space<vmem>>, %arg6: memref<512x2xbf16, #tpu.memory_space<vmem>>, %arg7: memref<1x2xf32, #tpu.memory_space<vmem>>, %arg8: memref<8x2xf32, #tpu.memory_space<vmem>>) attributes {dimension_semantics = [#tpu.dimension_semantics<parallel>], iteration_bounds = array<i64: 1>, scalar_prefetch = 0 : i64, scratch_operands = 0 : i64, tpu.core_type = #tpu.core_type<tc>, window_params = [{transform_indices = @transform_0, window_bounds = array<i64: 8, 4>}, {pipeline_mode = #tpu.pipeline_mode<synchronous>, transform_indices = @transform_1, window_bounds = array<i64: 4, 64>}, {pipeline_mode = #tpu.pipeline_mode<synchronous>, transform_indices = @transform_2, window_bounds = array<i64: 1, 64>}, {pipeline_mode = #tpu.pipeline_mode<synchronous>, transform_indices = @transform_3, window_bounds = array<i64: 64, 512>}, {pipeline_mode = #tpu.pipeline_mode<synchronous>, transform_indices = @transform_4, window_bounds = array<i64: 1, 512>}, {pipeline_mode = #tpu.pipeline_mode<synchronous>, transform_indices = @transform_5, window_bounds = array<i64: 512, 2>}, {pipeline_mode = #tpu.pipeline_mode<synchronous>, transform_indices = @transform_6, window_bounds = array<i64: 1, 2>}, {transform_indices = @transform_7, window_bounds = array<i64: 8, 2>}]} {
    %c0 = arith.constant 0 : index
    %c0_0 = arith.constant 0 : index
    %0 = vector.load %arg1[%c0, %c0_0] : memref<8x4xbf16, #tpu.memory_space<vmem>>, vector<8x4xbf16>
    %c0_1 = arith.constant 0 : index
    %c0_2 = arith.constant 0 : index
    %1 = vector.load %arg2[%c0_1, %c0_2] : memref<4x64xbf16, #tpu.memory_space<vmem>>, vector<4x64xbf16>
    %cst = arith.constant dense<0.000000e+00> : vector<8x64xf32>
    %2 = tpu.matmul %0, %1, %cst {dimension_numbers = #tpu.dot_dimension_numbers<[1], [0], [0], [1], [0, 0, 1, 1], [], []>} : vector<8x4xbf16>, vector<4x64xbf16>, vector<8x64xf32> -> vector<8x64xf32>
    %c0_3 = arith.constant 0 : index
    %c0_4 = arith.constant 0 : index
    %3 = vector.load %arg3[%c0_3, %c0_4] : memref<1x64xf32, #tpu.memory_space<vmem>>, vector<1x64xf32>
    %4 = vector.broadcast %3 : vector<1x64xf32> to vector<8x64xf32>
    %5 = arith.addf %2, %4 : vector<8x64xf32>
    %cst_5 = arith.constant 0.000000e+00 : f32
    %6 = vector.broadcast %cst_5 : f32 to vector<8x64xf32>
    %7 = arith.maximumf %5, %6 : vector<8x64xf32>
    %8 = arith.truncf %7 : vector<8x64xf32> to vector<8x64xbf16>
    %c0_6 = arith.constant 0 : index
    %c0_7 = arith.constant 0 : index
    %9 = vector.load %arg4[%c0_6, %c0_7] : memref<64x512xbf16, #tpu.memory_space<vmem>>, vector<64x512xbf16>
    %cst_8 = arith.constant dense<0.000000e+00> : vector<8x512xf32>
    %10 = tpu.matmul %8, %9, %cst_8 {dimension_numbers = #tpu.dot_dimension_numbers<[1], [0], [0], [1], [0, 0, 1, 1], [], []>} : vector<8x64xbf16>, vector<64x512xbf16>, vector<8x512xf32> -> vector<8x512xf32>
    %11 = arith.truncf %10 : vector<8x512xf32> to vector<8x512xbf16>
    %c0_9 = arith.constant 0 : index
    %c0_10 = arith.constant 0 : index
    %12 = vector.load %arg5[%c0_9, %c0_10] : memref<1x512xbf16, #tpu.memory_space<vmem>>, vector<1x512xbf16>
    %13 = vector.broadcast %12 : vector<1x512xbf16> to vector<8x512xbf16>
    %14 = arith.addf %11, %13 : vector<8x512xbf16>
    %cst_11 = arith.constant 0.000000e+00 : bf16
    %15 = vector.broadcast %cst_11 : bf16 to vector<8x512xbf16>
    %16 = arith.maximumf %14, %15 : vector<8x512xbf16>
    %c0_12 = arith.constant 0 : index
    %c0_13 = arith.constant 0 : index
    %17 = vector.load %arg6[%c0_12, %c0_13] : memref<512x2xbf16, #tpu.memory_space<vmem>>, vector<512x2xbf16>
    %cst_14 = arith.constant dense<0.000000e+00> : vector<8x2xf32>
    %18 = tpu.matmul %16, %17, %cst_14 {dimension_numbers = #tpu.dot_dimension_numbers<[1], [0], [0], [1], [0, 0, 1, 1], [], []>} : vector<8x512xbf16>, vector<512x2xbf16>, vector<8x2xf32> -> vector<8x2xf32>
    %c0_15 = arith.constant 0 : index
    %c0_16 = arith.constant 0 : index
    %19 = vector.load %arg7[%c0_15, %c0_16] : memref<1x2xf32, #tpu.memory_space<vmem>>, vector<1x2xf32>
    %20 = vector.broadcast %19 : vector<1x2xf32> to vector<8x2xf32>
    %21 = arith.addf %18, %20 : vector<8x2xf32>
    %c0_17 = arith.constant 0 : index
    %c0_18 = arith.constant 0 : index
    %22 = vector.load %arg8[%c0_17, %c0_18] : memref<8x2xf32, #tpu.memory_space<vmem>>, vector<8x2xf32>
    tpu.vector_store %arg8[%c0_17, %c0_18], %21 {strides = array<i32>} : memref<8x2xf32, #tpu.memory_space<vmem>>, vector<8x2xf32>,
    return
  }
  func.func @transform_0(%arg0: i32) -> (i32, i32) {
    %c0_i32 = arith.constant 0 : i32
    %c0_i32_0 = arith.constant 0 : i32
    return %arg0, %c0_i32 : i32, i32
  }
  func.func @transform_1(%arg0: i32) -> (i32, i32) {
    %c0_i32 = arith.constant 0 : i32
    %c0_i32_0 = arith.constant 0 : i32
    %c0_i32_1 = arith.constant 0 : i32
    return %c0_i32, %c0_i32_0 : i32, i32
  }
  func.func @transform_2(%arg0: i32) -> (i32, i32) {
    %c0_i32 = arith.constant 0 : i32
    %c0_i32_0 = arith.constant 0 : i32
    %c0_i32_1 = arith.constant 0 : i32
    return %c0_i32, %c0_i32_0 : i32, i32
  }
  func.func @transform_3(%arg0: i32) -> (i32, i32) {
    %c0_i32 = arith.constant 0 : i32
    %c0_i32_0 = arith.constant 0 : i32
    %c0_i32_1 = arith.constant 0 : i32
    return %c0_i32, %c0_i32_0 : i32, i32
  }
  func.func @transform_4(%arg0: i32) -> (i32, i32) {
    %c0_i32 = arith.constant 0 : i32
    %c0_i32_0 = arith.constant 0 : i32
    %c0_i32_1 = arith.constant 0 : i32
    return %c0_i32, %c0_i32_0 : i32, i32
  }
  func.func @transform_5(%arg0: i32) -> (i32, i32) {
    %c0_i32 = arith.constant 0 : i32
    %c0_i32_0 = arith.constant 0 : i32
    %c0_i32_1 = arith.constant 0 : i32
    return %c0_i32, %c0_i32_0 : i32, i32
  }
  func.func @transform_6(%arg0: i32) -> (i32, i32) {
    %c0_i32 = arith.constant 0 : i32
    %c0_i32_0 = arith.constant 0 : i32
    %c0_i32_1 = arith.constant 0 : i32
    return %c0_i32, %c0_i32_0 : i32, i32
  }
  func.func @transform_7(%arg0: i32) -> (i32, i32) {
    %c0_i32 = arith.constant 0 : i32
    %c0_i32_0 = arith.constant 0 : i32
    return %arg0, %c0_i32 : i32, i32
  }
}

</mosaic_0001>

<llo_original>
// kernel: qnetwork_forward.1
$region0: #{qnetwork_forward.1}
  #allocation0 [shape = 'u32[]', space=smem, size = 0x4, offset = 0x4, fixed_abs, tag = 'smem constant byte address 0x4 - core index']
  #allocation1 [shape = 'u32[144,128]{1,0:T(1,128)}', space=vmem, size = 0x12000, scoped, tag = 'internal scratch']
  %s0 = inlined_call_operand.vmem [shape: bf16[8,4], index: 0, kind: input, shape index: {}]
  %s1 = inlined_call_operand.vmem [shape: bf16[4,64], index: 1, kind: input, shape index: {}]
  %s2 = inlined_call_operand.vmem [shape: f32[1,64], index: 2, kind: input, shape index: {}]
  %s3 = inlined_call_operand.vmem [shape: bf16[64,512], index: 3, kind: input, shape index: {}]
  %s4 = inlined_call_operand.vmem [shape: bf16[1,512], index: 4, kind: input, shape index: {}]
  %s5 = inlined_call_operand.vmem [shape: bf16[512,2], index: 5, kind: input, shape index: {}]
  %s6 = inlined_call_operand.vmem [shape: f32[1,2], index: 6, kind: input, shape index: {}]
  %s7 = inlined_call_operand.vmem [shape: f32[8,2], index: 7, kind: output, shape index: {}]
  %s8 = sld [smem:[#allocation0]]
  $region38: #{qnetwork_forward.1} parent=0
    _
  %s10 = ssub.s32 1, %s8
  %s11 = scalar_select 0, %s10, %s8
  // Predicated region
  $region2: #{qnetwork_forward.1} parent=0 // pred_check
    _
  $region3: #{qnetwork_forward.1} parent=0 // pred_check_branch
    %13 = sbr.rel (0) target = $region5
  $region4: #{qnetwork_forward.1} parent=0 // pred_region
    _
  $region5: #{qnetwork_forward.1} parent=0 // pred_fallthru
    _
  // Predicated region
  $region6: #{qnetwork_forward.1} parent=0 // pred_check
    _
  $region7: #{qnetwork_forward.1} parent=0 // pred_check_branch
    %15 = sbr.rel (0) target = $region9
  $region8: #{qnetwork_forward.1} parent=0 // pred_region
    _
  $region9: #{qnetwork_forward.1} parent=0 // pred_fallthru
    _
  // Predicated region
  $region10: #{qnetwork_forward.1} parent=0 // pred_check
    _
  $region11: #{qnetwork_forward.1} parent=0 // pred_check_branch
    %17 = sbr.rel (0) target = $region13
  $region12: #{qnetwork_forward.1} parent=0 // pred_region
    _
  $region13: #{qnetwork_forward.1} parent=0 // pred_fallthru
    _
  // Predicated region
  $region14: #{qnetwork_forward.1} parent=0 // pred_check
    _
  $region15: #{qnetwork_forward.1} parent=0 // pred_check_branch
    %19 = sbr.rel (0) target = $region17
  $region16: #{qnetwork_forward.1} parent=0 // pred_region
    _
  $region17: #{qnetwork_forward.1} parent=0 // pred_fallthru
    _
  // Predicated region
  $region18: #{qnetwork_forward.1} parent=0 // pred_check
    _
  $region19: #{qnetwork_forward.1} parent=0 // pred_check_branch
    %21 = sbr.rel (0) target = $region21
  $region20: #{qnetwork_forward.1} parent=0 // pred_region
    _
  $region21: #{qnetwork_forward.1} parent=0 // pred_fallthru
    _
  // Predicated region
  $region22: #{qnetwork_forward.1} parent=0 // pred_check
    _
  $region23: #{qnetwork_forward.1} parent=0 // pred_check_branch
    %23 = sbr.rel (0) target = $region25
  $region24: #{qnetwork_forward.1} parent=0 // pred_region
    _
  $region25: #{qnetwork_forward.1} parent=0 // pred_fallthru
    _
  // Predicated region
  $region26: #{qnetwork_forward.1} parent=0 // pred_check
    _
  $region27: #{qnetwork_forward.1} parent=0 // pred_check_branch
    %25 = sbr.rel (0) target = $region29
  $region28: #{qnetwork_forward.1} parent=0 // pred_region
    _
  $region29: #{qnetwork_forward.1} parent=0 // pred_fallthru
    _
  %v27 = vld [vmem:[%s0] sm:$0xf]
  %v28 = vld [vmem:[%s1] sm:$0x3]
  %v29 = vld [vmem:[%s2] sm:$0x1]
  %v31 = vlaneseq
  %v32 = vshrl.u32 %v31, 7
  %v33 = vsub.s32 0, %v32
  %v34 = vrot.slane %v29, %v33
  %vm36 = vcmask 31744
  %v38 = vsel %vm36, %v27, 0
  %vm40 = vcmask 1041408
  %v42 = vsel %vm40, %v28, 0
  %44 = vmatprep.subr.bf16.mxu0 0
  %45 = vmatpush1.bf16.msra.mxu0 0
  %46 = vmatprep.subr.bf16.mxu0 0
  %47 = vmatpush1.bf16.msra.mxu0 0
  %48 = vmatprep.subr.bf16.mxu0 0
  %49 = vmatpush1.bf16.msra.mxu0 0
  %50 = vmatprep.subr.bf16.mxu0 0
  %51 = vmatpush1.bf16.msra.mxu0 0
  %52 = vmatprep.subr.bf16.mxu0 0
  %53 = vmatpush1.bf16.msra.mxu0 0
  %54 = vmatprep.subr.bf16.mxu0 0
  %55 = vmatpush1.bf16.msra.mxu0 0
  %56 = vmatprep.subr.bf16.mxu0 0
  %57 = vmatpush1.bf16.msra.mxu0 0
  %58 = vmatprep.subr.bf16.mxu0 0
  %59 = vmatpush1.bf16.msra.mxu0 %v42
  %60 = vmatprep.subr.bf16.mxu0 0
  %61 = vmatpush2.bf16.msra.mxu0 0
  %62 = vmatprep.subr.bf16.mxu0 0
  %63 = vmatpush2.bf16.msra.mxu0 0
  %64 = vmatprep.subr.bf16.mxu0 0
  %65 = vmatpush2.bf16.msra.mxu0 0
  %66 = vmatprep.subr.bf16.mxu0 0
  %67 = vmatpush2.bf16.msra.mxu0 0
  %68 = vmatprep.subr.bf16.mxu0 0
  %69 = vmatpush2.bf16.msra.mxu0 0
  %70 = vmatprep.subr.bf16.mxu0 0
  %71 = vmatpush2.bf16.msra.mxu0 0
  %72 = vmatprep.subr.bf16.mxu0 0
  %73 = vmatpush2.bf16.msra.mxu0 0
  %74 = vmatprep.subr.bf16.mxu0 0
  %75 = vmatpush2.bf16.msra.mxu0 0
  %76 = vmatprep.mubr.bf16.mxu0 0
  %77 = vmatmul.mubr.bf16.gmra.mxu0 %v38
  %v78 = vpop.f32.mrf.mxu0
  %v79 = vadd.f32 %v34, %v78
  %v80 = vpop.f32.mrf.mxu0
  %v81 = vpop.f32.mrf.mxu0
  %v82 = vpop.f32.mrf.mxu0
  %83 = vdwg.mxu0
  %v84 = vmax.f32 %v79, 0.0
  %v85 = vpack.c.bf16 %v84, %v84
  %v86 = vld [vmem:[%s3] sm:$0xff]
  %v87 = vld [vmem:[%s3 + $0x8] sm:$0xff]
  %v88 = vld [vmem:[%s3 + $0x10] sm:$0xff]
  %v89 = vld [vmem:[%s3 + $0x18] sm:$0xff]
  %v90 = vld [vmem:[%s3 + $0x20] sm:$0xff]
  %v91 = vld [vmem:[%s3 + $0x28] sm:$0xff]
  %v92 = vld [vmem:[%s3 + $0x30] sm:$0xff]
  %v93 = vld [vmem:[%s3 + $0x38] sm:$0xff]
  %v94 = vld [vmem:[%s3 + $0x40] sm:$0xff]
  %v95 = vld [vmem:[%s3 + $0x48] sm:$0xff]
  %v96 = vld [vmem:[%s3 + $0x50] sm:$0xff]
  %v97 = vld [vmem:[%s3 + $0x58] sm:$0xff]
  %v98 = vld [vmem:[%s3 + $0x60] sm:$0xff]
  %v99 = vld [vmem:[%s3 + $0x68] sm:$0xff]
  %v100 = vld [vmem:[%s3 + $0x70] sm:$0xff]
  %v101 = vld [vmem:[%s3 + $0x78] sm:$0xff]
  %v118 = vunpack.c.l.b16 %v86
  %v119 = vunpack.c.h.b16 %v86
  %v120 = vunpack.c.l.b16 %v87
  %v121 = vunpack.c.h.b16 %v87
  %v122 = vunpack.c.l.b16 %v88
  %v123 = vunpack.c.h.b16 %v88
  %v124 = vunpack.c.l.b16 %v89
  %v125 = vunpack.c.h.b16 %v89
  %v126 = vunpack.c.l.b16 %v90
  %v127 = vunpack.c.h.b16 %v90
  %v128 = vunpack.c.l.b16 %v91
  %v129 = vunpack.c.h.b16 %v91
  %v130 = vunpack.c.l.b16 %v92
  %v131 = vunpack.c.h.b16 %v92
  %v132 = vunpack.c.l.b16 %v93
  %v133 = vunpack.c.h.b16 %v93
  %v134 = vunpack.c.l.b16 %v94
  %v135 = vunpack.c.h.b16 %v94
  %v136 = vunpack.c.l.b16 %v95
  %v137 = vunpack.c.h.b16 %v95
  %v138 = vunpack.c.l.b16 %v96
  %v139 = vunpack.c.h.b16 %v96
  %v140 = vunpack.c.l.b16 %v97
  %v141 = vunpack.c.h.b16 %v97
  %v142 = vunpack.c.l.b16 %v98
  %v143 = vunpack.c.h.b16 %v98
  %v144 = vunpack.c.l.b16 %v99
  %v145 = vunpack.c.h.b16 %v99
  %v146 = vunpack.c.l.b16 %v100
  %v147 = vunpack.c.h.b16 %v100
  %v148 = vunpack.c.l.b16 %v101
  %v149 = vunpack.c.h.b16 %v101
  %v150 = vpack.c.b16 %v122, %v118
  %v151 = vpack.c.b16 %v123, %v119
  %v152 = vpack.c.b16 %v124, %v120
  %v153 = vpack.c.b16 %v125, %v121
  %v154 = vpack.c.b16 %v130, %v126
  %v155 = vpack.c.b16 %v131, %v127
  %v156 = vpack.c.b16 %v132, %v128
  %v157 = vpack.c.b16 %v133, %v129
  %v158 = vpack.c.b16 %v138, %v134
  %v159 = vpack.c.b16 %v139, %v135
  %v160 = vpack.c.b16 %v140, %v136
  %v161 = vpack.c.b16 %v141, %v137
  %v162 = vpack.c.b16 %v146, %v142
  %v163 = vpack.c.b16 %v147, %v143
  %v164 = vpack.c.b16 %v148, %v144
  %v165 = vpack.c.b16 %v149, %v145
  %vm182 = vcmask 523264
  %v184 = vsel %vm182, %v85, 0
  %186 = vmatprep.subr.bf16.mxu0 0
  %187 = vmatpush1.bf16.msra.mxu0 0
  %188 = vmatprep.subr.bf16.mxu0 0
  %189 = vmatpush1.bf16.msra.mxu0 0
  %190 = vmatprep.subr.bf16.mxu0 0
  %191 = vmatpush1.bf16.msra.mxu0 0
  %192 = vmatprep.subr.bf16.mxu0 0
  %193 = vmatpush1.bf16.msra.mxu0 0
  %194 = vmatprep.subr.bf16.mxu0 %v163
  %195 = vmatpush1.bf16.msra.mxu0 %v162
  %196 = vmatprep.subr.bf16.mxu0 %v159
  %197 = vmatpush1.bf16.msra.mxu0 %v158
  %198 = vmatprep.subr.bf16.mxu0 %v155
  %199 = vmatpush1.bf16.msra.mxu0 %v154
  %200 = vmatprep.subr.bf16.mxu0 %v151
  %201 = vmatpush1.bf16.msra.mxu0 %v150
  %202 = vmatprep.subr.bf16.mxu0 0
  %203 = vmatpush2.bf16.msra.mxu0 0
  %204 = vmatprep.subr.bf16.mxu0 0
  %205 = vmatpush2.bf16.msra.mxu0 0
  %206 = vmatprep.subr.bf16.mxu0 0
  %207 = vmatpush2.bf16.msra.mxu0 0
  %208 = vmatprep.subr.bf16.mxu0 0
  %209 = vmatpush2.bf16.msra.mxu0 0
  %210 = vmatprep.subr.bf16.mxu0 0
  %211 = vmatpush2.bf16.msra.mxu0 0
  %212 = vmatprep.subr.bf16.mxu0 0
  %213 = vmatpush2.bf16.msra.mxu0 0
  %214 = vmatprep.subr.bf16.mxu0 0
  %215 = vmatpush2.bf16.msra.mxu0 0
  %216 = vmatprep.subr.bf16.mxu0 0
  %217 = vmatpush2.bf16.msra.mxu0 0
  %218 = vmatprep.mubr.bf16.mxu0 0
  %219 = vmatmul.mubr.bf16.gmra.mxu0 %v184
  %v220 = vpop.f32.mrf.mxu0
  %v221 = vadd.f32 0.0, %v220
  %v222 = vpop.f32.mrf.mxu0
  %v223 = vadd.f32 0.0, %v222
  %v224 = vpop.f32.mrf.mxu0
  %v225 = vpop.f32.mrf.mxu0
  %226 = vdwg.mxu0
  %227 = vmatprep.subr.bf16.mxu0 0
  %228 = vmatpush1.bf16.msra.mxu0 0
  %229 = vmatprep.subr.bf16.mxu0 0
  %230 = vmatpush1.bf16.msra.mxu0 0
  %231 = vmatprep.subr.bf16.mxu0 0
  %232 = vmatpush1.bf16.msra.mxu0 0
  %233 = vmatprep.subr.bf16.mxu0 0
  %234 = vmatpush1.bf16.msra.mxu0 0
  %235 = vmatprep.subr.bf16.mxu0 %v165
  %236 = vmatpush1.bf16.msra.mxu0 %v164
  %237 = vmatprep.subr.bf16.mxu0 %v161
  %238 = vmatpush1.bf16.msra.mxu0 %v160
  %239 = vmatprep.subr.bf16.mxu0 %v157
  %240 = vmatpush1.bf16.msra.mxu0 %v156
  %241 = vmatprep.subr.bf16.mxu0 %v153
  %242 = vmatpush1.bf16.msra.mxu0 %v152
  %243 = vmatprep.subr.bf16.mxu0 0
  %244 = vmatpush2.bf16.msra.mxu0 0
  %245 = vmatprep.subr.bf16.mxu0 0
  %246 = vmatpush2.bf16.msra.mxu0 0
  %247 = vmatprep.subr.bf16.mxu0 0
  %248 = vmatpush2.bf16.msra.mxu0 0
  %249 = vmatprep.subr.bf16.mxu0 0
  %250 = vmatpush2.bf16.msra.mxu0 0
  %251 = vmatprep.subr.bf16.mxu0 0
  %252 = vmatpush2.bf16.msra.mxu0 0
  %253 = vmatprep.subr.bf16.mxu0 0
  %254 = vmatpush2.bf16.msra.mxu0 0
  %255 = vmatprep.subr.bf16.mxu0 0
  %256 = vmatpush2.bf16.msra.mxu0 0
  %257 = vmatprep.subr.bf16.mxu0 0
  %258 = vmatpush2.bf16.msra.mxu0 0
  %259 = vmatprep.mubr.bf16.mxu0 0
  %260 = vmatmul.mubr.bf16.gmra.mxu0 %v184
  %v261 = vpop.f32.mrf.mxu0
  %v262 = vadd.f32 0.0, %v261
  %v263 = vpop.f32.mrf.mxu0
  %v264 = vadd.f32 0.0, %v263
  %v265 = vpop.f32.mrf.mxu0
  %v266 = vpop.f32.mrf.mxu0
  %267 = vdwg.mxu0
  %v268 = vpack.c.bf16 %v221, %v221
  %v269 = vpack.c.bf16 %v223, %v223
  %v270 = vpack.c.bf16 %v262, %v262
  %v271 = vpack.c.bf16 %v264, %v264
  %v272 = vld [vmem:[%s4] sm:$0xf]
  %v275 = vunpack.c.l.s4 1966171168
  %v276 = vunpack.c.0.s8 %v275
  %v277 = vlaneseq
  %v278 = vshrl.u32 %v277, 7
  %v279 = vsub.s32 %v276, %v278
  %v280 = vrot.slane %v272, %v279
  %v281 = vcombine.high %v280, %v280
  %v283 = vunpack.c.l.s4 1966171168
  %v284 = vunpack.c.0.s8 %v283
  %v285 = vlaneseq
  %v286 = vshrl.u32 %v285, 7
  %v287 = vsub.s32 %v284, %v286
  %v288 = vrot.slane %v280, %v287
  %v290 = vunpack.c.l.s4 1966171168
  %v291 = vunpack.c.0.s8 %v290
  %v292 = vlaneseq
  %v293 = vshrl.u32 %v292, 7
  %v294 = vsub.s32 %v291, %v293
  %v295 = vrot.slane %v281, %v294
  %v296 = vcombine.high %v288, %v288
  %v297 = vcombine.high %v295, %v295
  %v299 = vpack.i.b16 %v288, %v288
  %v301 = vlaneseq
  %v302 = vshrl.u32 %v301, 7
  %v303 = vsub.s32 0, %v302
  %v304 = vrot.slane %v299, %v303
  %v306 = vpack.i.b16 %v295, %v295
  %v308 = vlaneseq
  %v309 = vshrl.u32 %v308, 7
  %v310 = vsub.s32 0, %v309
  %v311 = vrot.slane %v306, %v310
  %v313 = vpack.i.b16 %v296, %v296
  %v315 = vlaneseq
  %v316 = vshrl.u32 %v315, 7
  %v317 = vsub.s32 0, %v316
  %v318 = vrot.slane %v313, %v317
  %v320 = vpack.i.b16 %v297, %v297
  %v322 = vlaneseq
  %v323 = vshrl.u32 %v322, 7
  %v324 = vsub.s32 0, %v323
  %v325 = vrot.slane %v320, %v324
  %v326 = vadd.bf16 %v268, %v304
  %v327 = vadd.bf16 %v269, %v311
  %v328 = vadd.bf16 %v270, %v318
  %v329 = vadd.bf16 %v271, %v325
  %v330 = vmax.bf16 %v326, 0
  %v331 = vmax.bf16 %v327, 0
  %v332 = vmax.bf16 %v328, 0
  %v333 = vmax.bf16 %v329, 0
  %v334 = vld [vmem:[%s5] sm:$0xf]
  %v335 = vld [vmem:[%s5 + $0x4] sm:$0xf]
  %v336 = vld [vmem:[%s5 + $0x8] sm:$0xf]
  %v337 = vld [vmem:[%s5 + $0xc] sm:$0xf]
  %v338 = vld [vmem:[%s5 + $0x10] sm:$0xf]
  %v339 = vld [vmem:[%s5 + $0x14] sm:$0xf]
  %v340 = vld [vmem:[%s5 + $0x18] sm:$0xf]
  %v341 = vld [vmem:[%s5 + $0x1c] sm:$0xf]
  %v342 = vld [vmem:[%s5 + $0x20] sm:$0xf]
  %v343 = vld [vmem:[%s5 + $0x24] sm:$0xf]
  %v344 = vld [vmem:[%s5 + $0x28] sm:$0xf]
  %v345 = vld [vmem:[%s5 + $0x2c] sm:$0xf]
  %v346 = vld [vmem:[%s5 + $0x30] sm:$0xf]
  %v347 = vld [vmem:[%s5 + $0x34] sm:$0xf]
  %v348 = vld [vmem:[%s5 + $0x38] sm:$0xf]
  %v349 = vld [vmem:[%s5 + $0x3c] sm:$0xf]
  %v350 = vld [vmem:[%s5 + $0x40] sm:$0xf]
  %v351 = vld [vmem:[%s5 + $0x44] sm:$0xf]
  %v352 = vld [vmem:[%s5 + $0x48] sm:$0xf]
  %v353 = vld [vmem:[%s5 + $0x4c] sm:$0xf]
  %v354 = vld [vmem:[%s5 + $0x50] sm:$0xf]
  %v355 = vld [vmem:[%s5 + $0x54] sm:$0xf]
  %v356 = vld [vmem:[%s5 + $0x58] sm:$0xf]
  %v357 = vld [vmem:[%s5 + $0x5c] sm:$0xf]
  %v358 = vld [vmem:[%s5 + $0x60] sm:$0xf]
  %v359 = vld [vmem:[%s5 + $0x64] sm:$0xf]
  %v360 = vld [vmem:[%s5 + $0x68] sm:$0xf]
  %v361 = vld [vmem:[%s5 + $0x6c] sm:$0xf]
  %v362 = vld [vmem:[%s5 + $0x70] sm:$0xf]
  %v363 = vld [vmem:[%s5 + $0x74] sm:$0xf]
  %v364 = vld [vmem:[%s5 + $0x78] sm:$0xf]
  %v365 = vld [vmem:[%s5 + $0x7c] sm:$0xf]
  %v366 = vld [vmem:[%s5 + $0x80] sm:$0xf]
  %v367 = vld [vmem:[%s5 + $0x84] sm:$0xf]
  %v368 = vld [vmem:[%s5 + $0x88] sm:$0xf]
  %v369 = vld [vmem:[%s5 + $0x8c] sm:$0xf]
  %v370 = vld [vmem:[%s5 + $0x90] sm:$0xf]
  %v371 = vld [vmem:[%s5 + $0x94] sm:$0xf]
  %v372 = vld [vmem:[%s5 + $0x98] sm:$0xf]
  %v373 = vld [vmem:[%s5 + $0x9c] sm:$0xf]
  %v374 = vld [vmem:[%s5 + $0xa0] sm:$0xf]
  %v375 = vld [vmem:[%s5 + $0xa4] sm:$0xf]
  %v376 = vld [vmem:[%s5 + $0xa8] sm:$0xf]
  %v377 = vld [vmem:[%s5 + $0xac] sm:$0xf]
  %v378 = vld [vmem:[%s5 + $0xb0] sm:$0xf]
  %v379 = vld [vmem:[%s5 + $0xb4] sm:$0xf]
  %v380 = vld [vmem:[%s5 + $0xb8] sm:$0xf]
  %v381 = vld [vmem:[%s5 + $0xbc] sm:$0xf]
  %v382 = vld [vmem:[%s5 + $0xc0] sm:$0xf]
  %v383 = vld [vmem:[%s5 + $0xc4] sm:$0xf]
  %v384 = vld [vmem:[%s5 + $0xc8] sm:$0xf]
  %v385 = vld [vmem:[%s5 + $0xcc] sm:$0xf]
  %v386 = vld [vmem:[%s5 + $0xd0] sm:$0xf]
  %v387 = vld [vmem:[%s5 + $0xd4] sm:$0xf]
  %v388 = vld [vmem:[%s5 + $0xd8] sm:$0xf]
  %v389 = vld [vmem:[%s5 + $0xdc] sm:$0xf]
  %v390 = vld [vmem:[%s5 + $0xe0] sm:$0xf]
  %v391 = vld [vmem:[%s5 + $0xe4] sm:$0xf]
  %v392 = vld [vmem:[%s5 + $0xe8] sm:$0xf]
  %v393 = vld [vmem:[%s5 + $0xec] sm:$0xf]
  %v394 = vld [vmem:[%s5 + $0xf0] sm:$0xf]
  %v395 = vld [vmem:[%s5 + $0xf4] sm:$0xf]
  %v396 = vld [vmem:[%s5 + $0xf8] sm:$0xf]
  %v397 = vld [vmem:[%s5 + $0xfc] sm:$0xf]
  %v398 = vld [vmem:[%s6] sm:$0x1]
  %v400 = vlaneseq
  %v401 = vshrl.u32 %v400, 7
  %v402 = vsub.s32 0, %v401
  %v403 = vrot.slane %v398, %v402
  %v469 = vunpack.c.l.b16 %v334
  %v470 = vunpack.c.l.b16 %v335
  %v471 = vunpack.c.l.b16 %v336
  %v472 = vunpack.c.l.b16 %v337
  %v473 = vunpack.c.l.b16 %v338
  %v474 = vunpack.c.l.b16 %v339
  %v475 = vunpack.c.l.b16 %v340
  %v476 = vunpack.c.l.b16 %v341
  %v477 = vunpack.c.l.b16 %v342
  %v478 = vunpack.c.l.b16 %v343
  %v479 = vunpack.c.l.b16 %v344
  %v480 = vunpack.c.l.b16 %v345
  %v481 = vunpack.c.l.b16 %v346
  %v482 = vunpack.c.l.b16 %v347
  %v483 = vunpack.c.l.b16 %v348
  %v484 = vunpack.c.l.b16 %v349
  %v485 = vunpack.c.l.b16 %v350
  %v486 = vunpack.c.l.b16 %v351
  %v487 = vunpack.c.l.b16 %v352
  %v488 = vunpack.c.l.b16 %v353
  %v489 = vunpack.c.l.b16 %v354
  %v490 = vunpack.c.l.b16 %v355
  %v491 = vunpack.c.l.b16 %v356
  %v492 = vunpack.c.l.b16 %v357
  %v493 = vunpack.c.l.b16 %v358
  %v494 = vunpack.c.l.b16 %v359
  %v495 = vunpack.c.l.b16 %v360
  %v496 = vunpack.c.l.b16 %v361
  %v497 = vunpack.c.l.b16 %v362
  %v498 = vunpack.c.l.b16 %v363
  %v499 = vunpack.c.l.b16 %v364
  %v500 = vunpack.c.l.b16 %v365
  %v501 = vunpack.c.l.b16 %v366
  %v502 = vunpack.c.l.b16 %v367
  %v503 = vunpack.c.l.b16 %v368
  %v504 = vunpack.c.l.b16 %v369
  %v505 = vunpack.c.l.b16 %v370
  %v506 = vunpack.c.l.b16 %v371
  %v507 = vunpack.c.l.b16 %v372
  %v508 = vunpack.c.l.b16 %v373
  %v509 = vunpack.c.l.b16 %v374
  %v510 = vunpack.c.l.b16 %v375
  %v511 = vunpack.c.l.b16 %v376
  %v512 = vunpack.c.l.b16 %v377
  %v513 = vunpack.c.l.b16 %v378
  %v514 = vunpack.c.l.b16 %v379
  %v515 = vunpack.c.l.b16 %v380
  %v516 = vunpack.c.l.b16 %v381
  %v517 = vunpack.c.l.b16 %v382
  %v518 = vunpack.c.l.b16 %v383
  %v519 = vunpack.c.l.b16 %v384
  %v520 = vunpack.c.l.b16 %v385
  %v521 = vunpack.c.l.b16 %v386
  %v522 = vunpack.c.l.b16 %v387
  %v523 = vunpack.c.l.b16 %v388
  %v524 = vunpack.c.l.b16 %v389
  %v525 = vunpack.c.l.b16 %v390
  %v526 = vunpack.c.l.b16 %v391
  %v527 = vunpack.c.l.b16 %v392
  %v528 = vunpack.c.l.b16 %v393
  %v529 = vunpack.c.l.b16 %v394
  %v530 = vunpack.c.l.b16 %v395
  %v531 = vunpack.c.l.b16 %v396
  %v532 = vunpack.c.l.b16 %v397
  %v533 = vpack.c.b16 %v470, %v469
  %v534 = vpack.c.b16 %v472, %v471
  %v535 = vpack.c.b16 %v474, %v473
  %v536 = vpack.c.b16 %v476, %v475
  %v537 = vpack.c.b16 %v478, %v477
  %v538 = vpack.c.b16 %v480, %v479
  %v539 = vpack.c.b16 %v482, %v481
  %v540 = vpack.c.b16 %v484, %v483
  %v541 = vpack.c.b16 %v486, %v485
  %v542 = vpack.c.b16 %v488, %v487
  %v543 = vpack.c.b16 %v490, %v489
  %v544 = vpack.c.b16 %v492, %v491
  %v545 = vpack.c.b16 %v494, %v493
  %v546 = vpack.c.b16 %v496, %v495
  %v547 = vpack.c.b16 %v498, %v497
  %v548 = vpack.c.b16 %v500, %v499
  %v549 = vpack.c.b16 %v502, %v501
  %v550 = vpack.c.b16 %v504, %v503
  %v551 = vpack.c.b16 %v506, %v505
  %v552 = vpack.c.b16 %v508, %v507
  %v553 = vpack.c.b16 %v510, %v509
  %v554 = vpack.c.b16 %v512, %v511
  %v555 = vpack.c.b16 %v514, %v513
  %v556 = vpack.c.b16 %v516, %v515
  %v557 = vpack.c.b16 %v518, %v517
  %v558 = vpack.c.b16 %v520, %v519
  %v559 = vpack.c.b16 %v522, %v521
  %v560 = vpack.c.b16 %v524, %v523
  %v561 = vpack.c.b16 %v526, %v525
  %v562 = vpack.c.b16 %v528, %v527
  %v563 = vpack.c.b16 %v530, %v529
  %v564 = vpack.c.b16 %v532, %v531
  %597 = vmatprep.subr.bf16.mxu0 0
  %598 = vmatpush1.bf16.msra.mxu0 %v540
  %599 = vmatprep.subr.bf16.mxu0 0
  %600 = vmatpush1.bf16.msra.mxu0 %v539
  %601 = vmatprep.subr.bf16.mxu0 0
  %602 = vmatpush1.bf16.msra.mxu0 %v538
  %603 = vmatprep.subr.bf16.mxu0 0
  %604 = vmatpush1.bf16.msra.mxu0 %v537
  %605 = vmatprep.subr.bf16.mxu0 0
  %606 = vmatpush1.bf16.msra.mxu0 %v536
  %607 = vmatprep.subr.bf16.mxu0 0
  %608 = vmatpush1.bf16.msra.mxu0 %v535
  %609 = vmatprep.subr.bf16.mxu0 0
  %610 = vmatpush1.bf16.msra.mxu0 %v534
  %611 = vmatprep.subr.bf16.mxu0 0
  %612 = vmatpush1.bf16.msra.mxu0 %v533
  %613 = vmatprep.subr.bf16.mxu0 0
  %614 = vmatpush2.bf16.msra.mxu0 %v548
  %615 = vmatprep.subr.bf16.mxu0 0
  %616 = vmatpush2.bf16.msra.mxu0 %v547
  %617 = vmatprep.subr.bf16.mxu0 0
  %618 = vmatpush2.bf16.msra.mxu0 %v546
  %619 = vmatprep.subr.bf16.mxu0 0
  %620 = vmatpush2.bf16.msra.mxu0 %v545
  %621 = vmatprep.subr.bf16.mxu0 0
  %622 = vmatpush2.bf16.msra.mxu0 %v544
  %623 = vmatprep.subr.bf16.mxu0 0
  %624 = vmatpush2.bf16.msra.mxu0 %v543
  %625 = vmatprep.subr.bf16.mxu0 0
  %626 = vmatpush2.bf16.msra.mxu0 %v542
  %627 = vmatprep.subr.bf16.mxu0 0
  %628 = vmatpush2.bf16.msra.mxu0 %v541
  %629 = vmatprep.mubr.bf16.mxu0 %v331
  %630 = vmatmul.mubr.bf16.gmra.mxu0 %v330
  %v631 = vpop.f32.mrf.mxu0
  %v632 = vadd.f32 %v403, %v631
  %v633 = vpop.f32.mrf.mxu0
  %v634 = vpop.f32.mrf.mxu0
  %v635 = vpop.f32.mrf.mxu0
  %636 = vdwg.mxu0
  %637 = vmatprep.subr.bf16.mxu0 0
  %638 = vmatpush1.bf16.msra.mxu0 %v556
  %639 = vmatprep.subr.bf16.mxu0 0
  %640 = vmatpush1.bf16.msra.mxu0 %v555
  %641 = vmatprep.subr.bf16.mxu0 0
  %642 = vmatpush1.bf16.msra.mxu0 %v554
  %643 = vmatprep.subr.bf16.mxu0 0
  %644 = vmatpush1.bf16.msra.mxu0 %v553
  %645 = vmatprep.subr.bf16.mxu0 0
  %646 = vmatpush1.bf16.msra.mxu0 %v552
  %647 = vmatprep.subr.bf16.mxu0 0
  %648 = vmatpush1.bf16.msra.mxu0 %v551
  %649 = vmatprep.subr.bf16.mxu0 0
  %650 = vmatpush1.bf16.msra.mxu0 %v550
  %651 = vmatprep.subr.bf16.mxu0 0
  %652 = vmatpush1.bf16.msra.mxu0 %v549
  %653 = vmatprep.subr.bf16.mxu0 0
  %654 = vmatpush2.bf16.msra.mxu0 %v564
  %655 = vmatprep.subr.bf16.mxu0 0
  %656 = vmatpush2.bf16.msra.mxu0 %v563
  %657 = vmatprep.subr.bf16.mxu0 0
  %658 = vmatpush2.bf16.msra.mxu0 %v562
  %659 = vmatprep.subr.bf16.mxu0 0
  %660 = vmatpush2.bf16.msra.mxu0 %v561
  %661 = vmatprep.subr.bf16.mxu0 0
  %662 = vmatpush2.bf16.msra.mxu0 %v560
  %663 = vmatprep.subr.bf16.mxu0 0
  %664 = vmatpush2.bf16.msra.mxu0 %v559
  %665 = vmatprep.subr.bf16.mxu0 0
  %666 = vmatpush2.bf16.msra.mxu0 %v558
  %667 = vmatprep.subr.bf16.mxu0 0
  %668 = vmatpush2.bf16.msra.mxu0 %v557
  %669 = vmatprep.mubr.bf16.mxu0 %v333
  %670 = vmatmul.mubr.bf16.gmra.mxu0 %v332
  %v671 = vpop.f32.mrf.mxu0
  %v672 = vadd.f32 %v632, %v671
  %v673 = vpop.f32.mrf.mxu0
  %v674 = vpop.f32.mrf.mxu0
  %v675 = vpop.f32.mrf.mxu0
  %676 = vdwg.mxu0
  %vm677 = vcmask 15360
  %678 = vst.msk [vmem:[%s7] sm:$0xff] %vm677, %v672
  // Predicated region
  $region30: #{qnetwork_forward.1} parent=0 // pred_check
    _
  $region31: #{qnetwork_forward.1} parent=0 // pred_check_branch
    %680 = sbr.rel (0) target = $region33
  $region32: #{qnetwork_forward.1} parent=0 // pred_region
    _
  $region33: #{qnetwork_forward.1} parent=0 // pred_fallthru
    _
  // Predicated region
  $region34: #{qnetwork_forward.1} parent=0 // pred_check
    _
  $region35: #{qnetwork_forward.1} parent=0 // pred_check_branch
    %682 = sbr.rel (0) target = $region37
  $region36: #{qnetwork_forward.1} parent=0 // pred_region
    _
  $region37: #{qnetwork_forward.1} parent=0 // pred_fallthru
    _

</llo_original>
